<compile_context>
chip_gen: v5e
topology: v5e:2x2
jax: 0.10.0
libtpu: 0.0.40
codegen_flags: <defaults>
</compile_context>

<pallas_src>
import functools

import jax
import jax.numpy as jnp
from jax import lax
from jax.experimental import pallas as pl
from jax.experimental.pallas import tpu as pltpu

_BB = 8            # images per batch block (fills the 8 sublanes of a vreg)
_CK = 16           # max classes per grid step (class axis = reduction axis)
_BISECT_ITERS = 30  # bisection steps for the hard-negative top-k threshold
_NEG_INF = -1e30    # finite "-inf" for class padding / running-max init


def _trunc(x):
    # truncation toward zero (the reference stores offsets in a LongTensor)
    return jnp.where(x < 0, jnp.ceil(x), jnp.floor(x))


def _multibox_kernel(neg_pos_ratio,
                     tgt_ref, db_ref, loc_ref, conf_ref, out_ref,
                     m_sc, s_sc, ca_sc, lab_sc):
    k = pl.program_id(1)
    nk = pl.num_programs(1)

    bb, d = m_sc.shape
    nobj = tgt_ref.shape[0]
    ck = conf_ref.shape[0]

    # default-box rows (dboxes on lanes): [x0, y0, x1, y1, w, h, 1/w, 1/h]
    db = db_ref[...]
    r_x0 = db[0:1, :]; r_y0 = db[1:2, :]
    r_x1 = db[2:3, :]; r_y1 = db[3:4, :]
    r_w = db[4:5, :];  r_h = db[5:6, :]
    r_iw = db[6:7, :]; r_ih = db[7:8, :]
    area_d = r_w * r_h                                       # (1, D)

    row_iota = lax.broadcasted_iota(jnp.int32, (8, 128), 0)

    # ---- k == 0: matching + localization loss (class independent) -----------
    @pl.when(k == 0)
    def _match_and_loc():
        # Online argmax over objects: carry best IoU and the selected target
        # box / label as (BB, D) planes — no (NOBJ, BB, D) temporaries.
        def obj_body(j, carry):
            best, sx0, sy0, sx1, sy1, slab = carry
            row = tgt_ref[j]                                 # (BB, 8)
            tx0 = row[:, 0:1]; ty0 = row[:, 1:2]
            tx1 = row[:, 2:3]; ty1 = row[:, 3:4]
            tl = row[:, 4:5]
            iw = jnp.maximum(jnp.minimum(tx1, r_x1) - jnp.maximum(tx0, r_x0), 0.0)
            ih = jnp.maximum(jnp.minimum(ty1, r_y1) - jnp.maximum(ty0, r_y0), 0.0)
            inter = iw * ih                                  # (BB, D)
            area_t = (tx1 - tx0) * (ty1 - ty0)               # (BB, 1)
            iou = inter / (area_t + area_d - inter)          # exact divide
            upd = iou > best                                 # strict >: first match wins
            return (jnp.where(upd, iou, best),
                    jnp.where(upd, tx0, sx0), jnp.where(upd, ty0, sy0),
                    jnp.where(upd, tx1, sx1), jnp.where(upd, ty1, sy1),
                    jnp.where(upd, tl, slab))

        z = jnp.zeros((bb, d), jnp.float32)
        init = (jnp.full((bb, d), _NEG_INF, jnp.float32), z, z, z, z, z)
        best, sx0, sy0, sx1, sy1, slab = lax.fori_loop(0, nobj, obj_body, init)

        label = (slab + 1.0).astype(jnp.int32)
        label = jnp.where(best < 0.5, 0, label)              # ref hard-codes 0.5
        pos = label > 0

        # regression targets (get_offset), truncated toward zero like the ref
        dcx = (sx0 - r_x0 + sx1 - r_x1) * 5.0 * r_iw
        dcy = (sy0 - r_y0 + sy1 - r_y1) * 5.0 * r_ih
        dw = jnp.log((sx1 - sx0) * r_iw) * 5.0
        dh = jnp.log((sy1 - sy0) * r_ih) * 5.0

        loc = loc_ref[...].astype(jnp.float32)               # (4, BB, D)
        loss_l = jnp.float32(0.0)
        for j, off in enumerate((dcx, dcy, dw, dh)):
            dd = loc[j] - _trunc(off)
            ad = jnp.abs(dd)
            sl1 = jnp.where(ad < 1.0, 0.5 * dd * dd, ad - 0.5)
            loss_l = loss_l + jnp.sum(jnp.where(pos, sl1, 0.0))

        lab_sc[...] = label
        m_sc[...] = jnp.full((bb, d), _NEG_INF, jnp.float32)
        s_sc[...] = jnp.zeros((bb, d), jnp.float32)
        ca_sc[...] = jnp.zeros((bb, d), jnp.float32)
        # stash the loc-loss partial in row 0 of this block's resident out tile
        out_ref[0] = jnp.where(row_iota == 0, loss_l, 0.0)

    # ---- every step: streamed online logsumexp over the class chunk ----------
    cf = conf_ref[...].astype(jnp.float32)                   # (CK, BB, D)
    chunk_max = jnp.max(cf, axis=0)                          # (BB, D)
    m_old = m_sc[...]
    m_new = jnp.maximum(m_old, chunk_max)
    s_sc[...] = (s_sc[...] * jnp.exp(m_old - m_new)
                 + jnp.sum(jnp.exp(cf - m_new[None]), axis=0))
    m_sc[...] = m_new

    # gather the logit at the matched label via a scalar class-index compare per
    # class in the chunk (no (C, BB, D) one-hot / iota).
    lab = lab_sc[...]
    ca = ca_sc[...]
    base = k * ck
    for j in range(ck):
        ca = ca + jnp.where(lab == base + j, cf[j], 0.0)
    ca_sc[...] = ca

    # ---- last step: cross entropy + hard-negative mining + write partials ----
    @pl.when(k == nk - 1)
    def _finalize():
        lab2 = lab_sc[...]
        pos = lab2 > 0
        lse = m_sc[...] + jnp.log(s_sc[...])
        ce = lse - ca_sc[...]                                # (BB, D) per-dbox CE

        num_pos_i = jnp.sum(pos.astype(jnp.float32), axis=1, keepdims=True)
        num_neg_i = jnp.minimum(num_pos_i * neg_pos_ratio, float(d))  # clamp to D

        ce_pos_sum = jnp.sum(jnp.where(pos, ce, 0.0))
        ce_m = jnp.where(pos, 0.0, ce)                       # positives zeroed (as ref)

        # top-num_neg sum via per-image bisection of the threshold value
        # (tie-invariant, so it equals the reference's sorted selection sum).
        hi0 = jnp.max(ce_m, axis=1, keepdims=True) + 1.0
        lo0 = jnp.zeros((bb, 1), jnp.float32)

        def bisect_body(_, carry):
            lo, hi = carry
            mid = 0.5 * (lo + hi)
            cnt = jnp.sum((ce_m >= mid).astype(jnp.float32), axis=1, keepdims=True)
            take_lo = cnt >= num_neg_i
            return (jnp.where(take_lo, mid, lo), jnp.where(take_lo, hi, mid))

        thr, _ = lax.fori_loop(0, _BISECT_ITERS, bisect_body, (lo0, hi0))
        above = ce_m > thr
        n_above = jnp.sum(above.astype(jnp.float32), axis=1, keepdims=True)
        sum_above = jnp.sum(jnp.where(above, ce_m, 0.0), axis=1, keepdims=True)
        neg_sum_i = sum_above + (num_neg_i - n_above) * thr  # (BB, 1)

        loss_c = ce_pos_sum + jnp.sum(neg_sum_i)
        num_pos_tot = jnp.sum(num_pos_i)

        out_ref[0] = (out_ref[0]
                      + jnp.where(row_iota == 1, loss_c, 0.0)
                      + jnp.where(row_iota == 2, num_pos_tot, 0.0))


def multibox_loss(loc_data, conf_data, dboxes, target_bboxes, target_labels,
                  neg_pos=3):
    """predictions = (loc_data (B,D,4), conf_data (B,D,C), dboxes (D,4));
    target_bboxes (B,NOBJ,4), target_labels (B,NOBJ).  Returns (loss_l, loss_c)."""
    B, D, _ = loc_data.shape
    C = conf_data.shape[2]
    NOBJ = target_bboxes.shape[1]

    B_pad = ((B + _BB - 1) // _BB) * _BB
    pad_b = B_pad - B

    # loc/conf keep their native dtype (bf16 activations stream as bf16;
    # the kernel upcasts per block/chunk to f32).
    loc = loc_data
    conf = conf_data
    tb = target_bboxes.astype(jnp.float32)
    tl = target_labels.astype(jnp.float32)
    if pad_b:
        # zero-padded images: IoU == 0 -> no positives, num_neg == 0 -> zero
        # contribution to every accumulated sum (no full grid step is ever
        # all-padding, so no pl.when skip is needed).
        loc = jnp.concatenate([loc, jnp.zeros((pad_b, D, 4), loc.dtype)], 0)
        conf = jnp.concatenate([conf, jnp.zeros((pad_b, D, C), conf.dtype)], 0)
        tb = jnp.concatenate([tb, jnp.zeros((pad_b, NOBJ, 4), jnp.float32)], 0)
        tl = jnp.concatenate([tl, jnp.zeros((pad_b, NOBJ), jnp.float32)], 0)

    # merged target tensor (NOBJ, B_pad, 8): [x0,y0,x1,y1,label,0,0,0]
    tgt = jnp.concatenate(
        [tb, tl[..., None], jnp.zeros((B_pad, NOBJ, 3), jnp.float32)], axis=-1)
    tgt = jnp.transpose(tgt, (1, 0, 2))

    # augmented default boxes (8, D): coords + precomputed w, h, 1/w, 1/h
    dbf = dboxes.astype(jnp.float32)
    w = dbf[:, 2] - dbf[:, 0]
    h = dbf[:, 3] - dbf[:, 1]
    db_aug = jnp.stack([dbf[:, 0], dbf[:, 1], dbf[:, 2], dbf[:, 3],
                        w, h, 1.0 / w, 1.0 / h], axis=0)     # (8, D)

    # dbox-on-lanes layouts.
    # TODO(synk): at SSD scale the producer should emit these directly.
    loc_t = jnp.transpose(loc, (2, 0, 1))                    # (4, B_pad, D)
    conf_t = jnp.transpose(conf, (2, 0, 1))                  # (C, B_pad, D)

    ck = min(_CK, C)
    nk = (C + ck - 1) // ck
    c_pad = nk * ck - C
    if c_pad:
        # padded classes at -1e30: exp underflows to 0, never matches a label
        conf_t = jnp.concatenate(
            [conf_t, jnp.full((c_pad, B_pad, D), _NEG_INF, conf_t.dtype)], 0)

    ni = B_pad // _BB

    # explicit scoped-VMEM budget sized to the chosen blocks (+ temp headroom)
    blk_bytes = 2 * (ck * _BB * D * conf_t.dtype.itemsize
                     + 4 * _BB * D * loc_t.dtype.itemsize
                     + NOBJ * _BB * 8 * 4 + 8 * D * 4 + 8 * 128 * 4)
    scratch_bytes = 4 * _BB * D * 4
    temp_bytes = (16 * _BB * D + 2 * ck * _BB * D) * 4
    vmem_limit = int(min(max(2 * (blk_bytes + scratch_bytes + temp_bytes),
                             32 << 20), 64 << 20))

    kernel = functools.partial(_multibox_kernel, float(neg_pos))

    out = pl.pallas_call(
        kernel,
        out_shape=jax.ShapeDtypeStruct((ni, 8, 128), jnp.float32),
        grid_spec=pltpu.PrefetchScalarGridSpec(
            num_scalar_prefetch=0,
            grid=(ni, nk),                                   # (batch blocks, class chunks)
            in_specs=[
                pl.BlockSpec((NOBJ, _BB, 8), lambda i, k: (0, i, 0)),
                pl.BlockSpec((8, D), lambda i, k: (0, 0)),
                pl.BlockSpec((4, _BB, D), lambda i, k: (0, i, 0)),
                pl.BlockSpec((ck, _BB, D), lambda i, k: (k, i, 0)),
            ],
            out_specs=pl.BlockSpec((1, 8, 128), lambda i, k: (i, 0, 0)),
            scratch_shapes=[
                pltpu.VMEM((_BB, D), jnp.float32),   # running max over classes
                pltpu.VMEM((_BB, D), jnp.float32),   # running sum of exp
                pltpu.VMEM((_BB, D), jnp.float32),   # logit gathered at label
                pltpu.VMEM((_BB, D), jnp.int32),     # matched label
            ],
        ),
        compiler_params=pltpu.CompilerParams(
            dimension_semantics=("parallel", "arbitrary"),
            vmem_limit_bytes=vmem_limit),
    )(tgt, db_aug, loc_t, conf_t)

    tot = jnp.sum(out[:, :, 0], axis=0)                      # (8,)
    loss_l = tot[0]
    loss_c = tot[1]
    n = tot[2]
    # reference divides by total num_pos (inf/NaN if zero positives, as in ref)
    return loss_l / n, loss_c / n


if __name__ == "__main__":
    key = jax.random.PRNGKey(0)
    B, D, C, NOBJ = 2, 128, 8, 4   # batch, num_dbox, num_classes, objects/image

    # default boxes: 8x8 grid of centers x 2 scales = 128 anchors
    g = (jnp.arange(8, dtype=jnp.float32) + 0.5) / 8.0
    cy, cx = jnp.meshgrid(g, g, indexing="ij")
    cx = cx.reshape(-1)
    cy = cy.reshape(-1)
    anchors = []
    for s in (0.2, 0.35):
        anchors.append(jnp.stack([cx - s / 2, cy - s / 2,
                                  cx + s / 2, cy + s / 2], axis=1))
    dboxes = jnp.concatenate(anchors, axis=0)                          # (128, 4)

    k1, k2, k3, k4, k5 = jax.random.split(key, 5)
    # targets = jittered copies of some default boxes (guarantees IoU > 0.5)
    pick = jax.random.randint(k1, (B, NOBJ), 0, D)
    jitter = 0.01 * jax.random.normal(k2, (B, NOBJ, 4), dtype=jnp.float32)
    target_bboxes = dboxes[pick] + jitter                              # (B, NOBJ, 4)
    target_labels = jax.random.randint(k3, (B, NOBJ), 0, C - 1)        # (B, NOBJ)

    loc_data = 0.5 * jax.random.normal(k4, (B, D, 4), dtype=jnp.float32)
    conf_data = jax.random.normal(k5, (B, D, C), dtype=jnp.float32)

    loss_l, loss_c = multibox_loss(loc_data, conf_data, dboxes,
                                   target_bboxes, target_labels, neg_pos=3)
    jax.block_until_ready((loss_l, loss_c))
    print("KERNEL_OK")
</pallas_src>

<mosaic_0001>
module attributes {stable_mosaic.version = 11 : i64} {
  func.func @_multibox_kernel(%arg0: i32, %arg1: i32, %arg2: memref<4x8x8xf32, #tpu.memory_space<vmem>>, %arg3: memref<8x128xf32, #tpu.memory_space<vmem>>, %arg4: memref<4x8x128xf32, #tpu.memory_space<vmem>>, %arg5: memref<8x8x128xf32, #tpu.memory_space<vmem>>, %arg6: memref<1x8x128xf32, #tpu.memory_space<vmem>>, %arg7: memref<8x128xf32, #tpu.memory_space<vmem>>, %arg8: memref<8x128xf32, #tpu.memory_space<vmem>>, %arg9: memref<8x128xf32, #tpu.memory_space<vmem>>, %arg10: memref<8x128xi32, #tpu.memory_space<vmem>>) attributes {dimension_semantics = [#tpu.dimension_semantics<parallel>, #tpu.dimension_semantics<arbitrary>], iteration_bounds = array<i64: 1, 1>, scalar_prefetch = 0 : i64, scratch_operands = 4 : i64, tpu.core_type = #tpu.core_type<tc>, window_params = [{transform_indices = @transform_0, window_bounds = array<i64: 4, 8, 8>}, {pipeline_mode = #tpu.pipeline_mode<synchronous>, transform_indices = @transform_1, window_bounds = array<i64: 8, 128>}, {transform_indices = @transform_2, window_bounds = array<i64: 4, 8, 128>}, {transform_indices = @transform_3, window_bounds = array<i64: 8, 8, 128>}, {transform_indices = @transform_4, window_bounds = array<i64: 1, 8, 128>}]} {
    %c0 = arith.constant 0 : index
    %c0_0 = arith.constant 0 : index
    %0 = vector.load %arg3[%c0, %c0_0] : memref<8x128xf32, #tpu.memory_space<vmem>>, vector<8x128xf32>
    %1 = vector.extract_strided_slice %0 {offsets = [0, 0], sizes = [1, 128], strides = [1, 1]} : vector<8x128xf32> to vector<1x128xf32>
    %2 = vector.extract_strided_slice %0 {offsets = [1, 0], sizes = [1, 128], strides = [1, 1]} : vector<8x128xf32> to vector<1x128xf32>
    %3 = vector.extract_strided_slice %0 {offsets = [2, 0], sizes = [1, 128], strides = [1, 1]} : vector<8x128xf32> to vector<1x128xf32>
    %4 = vector.extract_strided_slice %0 {offsets = [3, 0], sizes = [1, 128], strides = [1, 1]} : vector<8x128xf32> to vector<1x128xf32>
    %5 = vector.extract_strided_slice %0 {offsets = [4, 0], sizes = [1, 128], strides = [1, 1]} : vector<8x128xf32> to vector<1x128xf32>
    %6 = vector.extract_strided_slice %0 {offsets = [5, 0], sizes = [1, 128], strides = [1, 1]} : vector<8x128xf32> to vector<1x128xf32>
    %7 = vector.extract_strided_slice %0 {offsets = [6, 0], sizes = [1, 128], strides = [1, 1]} : vector<8x128xf32> to vector<1x128xf32>
    %8 = vector.extract_strided_slice %0 {offsets = [7, 0], sizes = [1, 128], strides = [1, 1]} : vector<8x128xf32> to vector<1x128xf32>
    %9 = arith.mulf %5, %6 : vector<1x128xf32>
    %10 = tpu.iota {dimensions = array<i32: 0>} : vector<8x128xi32>
    %c0_i32 = arith.constant 0 : i32
    %11 = arith.cmpi eq, %arg1, %c0_i32 : i32
    %12 = arith.extui %11 : i1 to i32
    %c0_i32_1 = arith.constant 0 : i32
    %13 = arith.cmpi ne, %12, %c0_i32_1 : i32
    scf.if %13 {
      %cst_31 = arith.constant 0.000000e+00 : f32
      %101 = vector.broadcast %cst_31 : f32 to vector<8x128xf32>
      %cst_32 = arith.constant -1.000000e+30 : f32
      %102 = vector.broadcast %cst_32 : f32 to vector<8x128xf32>
      %c0_i32_33 = arith.constant 0 : i32
      %c4_i32_34 = arith.constant 4 : i32
      %103 = arith.addi %c0_i32_33, %c4_i32_34 : i32
      %c1_i32_35 = arith.constant 1 : i32
      %104:6 = scf.for %arg11 = %c0_i32_33 to %103 step %c1_i32_35 iter_args(%arg12 = %102, %arg13 = %101, %arg14 = %101, %arg15 = %101, %arg16 = %101, %arg17 = %101) -> (vector<8x128xf32>, vector<8x128xf32>, vector<8x128xf32>, vector<8x128xf32>, vector<8x128xf32>, vector<8x128xf32>)  : i32 {
        %256 = arith.index_cast %arg11 : i32 to index
        %c0_89 = arith.constant 0 : index
        %c0_90 = arith.constant 0 : index
        %257 = vector.load %arg2[%256, %c0_89, %c0_90] : memref<4x8x8xf32, #tpu.memory_space<vmem>>, vector<1x8x8xf32>
        %258 = vector.shape_cast %257 : vector<1x8x8xf32> to vector<8x8xf32>
        %259 = vector.extract_strided_slice %258 {offsets = [0, 0], sizes = [8, 1], strides = [1, 1]} : vector<8x8xf32> to vector<8x1xf32>
        %260 = vector.extract_strided_slice %258 {offsets = [0, 1], sizes = [8, 1], strides = [1, 1]} : vector<8x8xf32> to vector<8x1xf32>
        %261 = vector.extract_strided_slice %258 {offsets = [0, 2], sizes = [8, 1], strides = [1, 1]} : vector<8x8xf32> to vector<8x1xf32>
        %262 = vector.extract_strided_slice %258 {offsets = [0, 3], sizes = [8, 1], strides = [1, 1]} : vector<8x8xf32> to vector<8x1xf32>
        %263 = vector.extract_strided_slice %258 {offsets = [0, 4], sizes = [8, 1], strides = [1, 1]} : vector<8x8xf32> to vector<8x1xf32>
        %264 = vector.broadcast %261 : vector<8x1xf32> to vector<8x128xf32>
        %265 = vector.broadcast %3 : vector<1x128xf32> to vector<8x128xf32>
        %266 = arith.minimumf %264, %265 : vector<8x128xf32>
        %267 = vector.broadcast %259 : vector<8x1xf32> to vector<8x128xf32>
        %268 = vector.broadcast %1 : vector<1x128xf32> to vector<8x128xf32>
        %269 = arith.maximumf %267, %268 : vector<8x128xf32>
        %270 = arith.subf %266, %269 : vector<8x128xf32>
        %cst_91 = arith.constant 0.000000e+00 : f32
        %271 = vector.broadcast %cst_91 : f32 to vector<8x128xf32>
        %272 = arith.maximumf %270, %271 : vector<8x128xf32>
        %273 = vector.broadcast %262 : vector<8x1xf32> to vector<8x128xf32>
        %274 = vector.broadcast %4 : vector<1x128xf32> to vector<8x128xf32>
        %275 = arith.minimumf %273, %274 : vector<8x128xf32>
        %276 = vector.broadcast %260 : vector<8x1xf32> to vector<8x128xf32>
        %277 = vector.broadcast %2 : vector<1x128xf32> to vector<8x128xf32>
        %278 = arith.maximumf %276, %277 : vector<8x128xf32>
        %279 = arith.subf %275, %278 : vector<8x128xf32>
        %cst_92 = arith.constant 0.000000e+00 : f32
        %280 = vector.broadcast %cst_92 : f32 to vector<8x128xf32>
        %281 = arith.maximumf %279, %280 : vector<8x128xf32>
        %282 = arith.mulf %272, %281 : vector<8x128xf32>
        %283 = arith.subf %261, %259 : vector<8x1xf32>
        %284 = arith.subf %262, %260 : vector<8x1xf32>
        %285 = arith.mulf %283, %284 : vector<8x1xf32>
        %286 = vector.broadcast %285 : vector<8x1xf32> to vector<8x128xf32>
        %287 = vector.broadcast %9 : vector<1x128xf32> to vector<8x128xf32>
        %288 = arith.addf %286, %287 : vector<8x128xf32>
        %289 = arith.subf %288, %282 : vector<8x128xf32>
        %290 = arith.divf %282, %289 : vector<8x128xf32>
        %291 = arith.cmpf ogt, %290, %arg12 : vector<8x128xf32>
        %292 = arith.select %291, %290, %arg12 : vector<8x128xi1>, vector<8x128xf32>
        %293 = vector.shape_cast %259 : vector<8x1xf32> to vector<8x1xf32>
        %294 = vector.broadcast %293 : vector<8x1xf32> to vector<8x128xf32>
        %295 = arith.select %291, %294, %arg13 : vector<8x128xi1>, vector<8x128xf32>
        %296 = vector.shape_cast %260 : vector<8x1xf32> to vector<8x1xf32>
        %297 = vector.broadcast %296 : vector<8x1xf32> to vector<8x128xf32>
        %298 = arith.select %291, %297, %arg14 : vector<8x128xi1>, vector<8x128xf32>
        %299 = vector.shape_cast %261 : vector<8x1xf32> to vector<8x1xf32>
        %300 = vector.broadcast %299 : vector<8x1xf32> to vector<8x128xf32>
        %301 = arith.select %291, %300, %arg15 : vector<8x128xi1>, vector<8x128xf32>
        %302 = vector.shape_cast %262 : vector<8x1xf32> to vector<8x1xf32>
        %303 = vector.broadcast %302 : vector<8x1xf32> to vector<8x128xf32>
        %304 = arith.select %291, %303, %arg16 : vector<8x128xi1>, vector<8x128xf32>
        %305 = vector.shape_cast %263 : vector<8x1xf32> to vector<8x1xf32>
        %306 = vector.broadcast %305 : vector<8x1xf32> to vector<8x128xf32>
        %307 = arith.select %291, %306, %arg17 : vector<8x128xi1>, vector<8x128xf32>
        scf.yield %292, %295, %298, %301, %304, %307 : vector<8x128xf32>, vector<8x128xf32>, vector<8x128xf32>, vector<8x128xf32>, vector<8x128xf32>, vector<8x128xf32>
      }
      %c4_i32_36 = arith.constant 4 : i32
      %cst_37 = arith.constant 1.000000e+00 : f32
      %105 = vector.broadcast %cst_37 : f32 to vector<8x128xf32>
      %106 = arith.addf %104#5, %105 : vector<8x128xf32>
      %107 = arith.fptosi %106 : vector<8x128xf32> to vector<8x128xi32>
      %cst_38 = arith.constant 5.000000e-01 : f32
      %108 = vector.broadcast %cst_38 : f32 to vector<8x128xf32>
      %109 = arith.cmpf olt, %104#0, %108 : vector<8x128xf32>
      %c0_i32_39 = arith.constant 0 : i32
      %110 = vector.broadcast %c0_i32_39 : i32 to vector<8x128xi32>
      %111 = arith.select %109, %110, %107 : vector<8x128xi1>, vector<8x128xi32>
      %c0_i32_40 = arith.constant 0 : i32
      %112 = vector.broadcast %c0_i32_40 : i32 to vector<8x128xi32>
      %113 = arith.cmpi sgt, %111, %112 : vector<8x128xi32>
      %114 = vector.broadcast %1 : vector<1x128xf32> to vector<8x128xf32>
      %115 = arith.subf %104#1, %114 : vector<8x128xf32>
      %116 = arith.addf %115, %104#3 : vector<8x128xf32>
      %117 = vector.broadcast %3 : vector<1x128xf32> to vector<8x128xf32>
      %118 = arith.subf %116, %117 : vector<8x128xf32>
      %cst_41 = arith.constant 5.000000e+00 : f32
      %119 = vector.broadcast %cst_41 : f32 to vector<8x128xf32>
      %120 = arith.mulf %118, %119 : vector<8x128xf32>
      %121 = vector.broadcast %7 : vector<1x128xf32> to vector<8x128xf32>
      %122 = arith.mulf %120, %121 : vector<8x128xf32>
      %123 = vector.broadcast %2 : vector<1x128xf32> to vector<8x128xf32>
      %124 = arith.subf %104#2, %123 : vector<8x128xf32>
      %125 = arith.addf %124, %104#4 : vector<8x128xf32>
      %126 = vector.broadcast %4 : vector<1x128xf32> to vector<8x128xf32>
      %127 = arith.subf %125, %126 : vector<8x128xf32>
      %cst_42 = arith.constant 5.000000e+00 : f32
      %128 = vector.broadcast %cst_42 : f32 to vector<8x128xf32>
      %129 = arith.mulf %127, %128 : vector<8x128xf32>
      %130 = vector.broadcast %8 : vector<1x128xf32> to vector<8x128xf32>
      %131 = arith.mulf %129, %130 : vector<8x128xf32>
      %132 = arith.subf %104#3, %104#1 : vector<8x128xf32>
      %133 = vector.broadcast %7 : vector<1x128xf32> to vector<8x128xf32>
      %134 = arith.mulf %132, %133 : vector<8x128xf32>
      %135 = math.log %134 : vector<8x128xf32>
      %cst_43 = arith.constant 5.000000e+00 : f32
      %136 = vector.broadcast %cst_43 : f32 to vector<8x128xf32>
      %137 = arith.mulf %135, %136 : vector<8x128xf32>
      %138 = arith.subf %104#4, %104#2 : vector<8x128xf32>
      %139 = vector.broadcast %8 : vector<1x128xf32> to vector<8x128xf32>
      %140 = arith.mulf %138, %139 : vector<8x128xf32>
      %141 = math.log %140 : vector<8x128xf32>
      %cst_44 = arith.constant 5.000000e+00 : f32
      %142 = vector.broadcast %cst_44 : f32 to vector<8x128xf32>
      %143 = arith.mulf %141, %142 : vector<8x128xf32>
      %c0_45 = arith.constant 0 : index
      %c0_46 = arith.constant 0 : index
      %c0_47 = arith.constant 0 : index
      %144 = vector.load %arg4[%c0_45, %c0_46, %c0_47] : memref<4x8x128xf32, #tpu.memory_space<vmem>>, vector<4x8x128xf32>
      %145 = vector.extract_strided_slice %144 {offsets = [0, 0, 0], sizes = [1, 8, 128], strides = [1, 1, 1]} : vector<4x8x128xf32> to vector<1x8x128xf32>
      %146 = vector.shape_cast %145 : vector<1x8x128xf32> to vector<8x128xf32>
      %cst_48 = arith.constant 0.000000e+00 : f32
      %147 = vector.broadcast %cst_48 : f32 to vector<8x128xf32>
      %148 = arith.cmpf olt, %122, %147 : vector<8x128xf32>
      %149 = math.ceil %122 : vector<8x128xf32>
      %150 = math.floor %122 : vector<8x128xf32>
      %151 = arith.select %148, %149, %150 : vector<8x128xi1>, vector<8x128xf32>
      %152 = arith.subf %146, %151 : vector<8x128xf32>
      %153 = math.absf %152 : vector<8x128xf32>
      %cst_49 = arith.constant 1.000000e+00 : f32
      %154 = vector.broadcast %cst_49 : f32 to vector<8x128xf32>
      %155 = arith.cmpf olt, %153, %154 : vector<8x128xf32>
      %cst_50 = arith.constant 5.000000e-01 : f32
      %156 = vector.broadcast %cst_50 : f32 to vector<8x128xf32>
      %157 = arith.mulf %156, %152 : vector<8x128xf32>
      %158 = arith.mulf %157, %152 : vector<8x128xf32>
      %cst_51 = arith.constant 5.000000e-01 : f32
      %159 = vector.broadcast %cst_51 : f32 to vector<8x128xf32>
      %160 = arith.subf %153, %159 : vector<8x128xf32>
      %161 = arith.select %155, %158, %160 : vector<8x128xi1>, vector<8x128xf32>
      %cst_52 = arith.constant 0.000000e+00 : f32
      %162 = vector.broadcast %cst_52 : f32 to vector<8x128xf32>
      %163 = arith.select %113, %161, %162 : vector<8x128xi1>, vector<8x128xf32>
      %164 = vector.shape_cast %163 : vector<8x128xf32> to vector<1x8x128xf32>
      %cst_53 = arith.constant dense<0.000000e+00> : vector<1xf32>
      %165 = vector.multi_reduction <add>, %164, %cst_53 [1, 2] : vector<1x8x128xf32> to vector<1xf32>
      %166 = vector.shape_cast %165 : vector<1xf32> to vector<1x1x1xf32>
      %167 = vector.extract %166[0, 0, 0] : f32 from vector<1x1x1xf32>
      %cst_54 = arith.constant 0.000000e+00 : f32
      %168 = arith.addf %cst_54, %167 : f32
      %169 = vector.extract_strided_slice %144 {offsets = [1, 0, 0], sizes = [1, 8, 128], strides = [1, 1, 1]} : vector<4x8x128xf32> to vector<1x8x128xf32>
      %170 = vector.shape_cast %169 : vector<1x8x128xf32> to vector<8x128xf32>
      %cst_55 = arith.constant 0.000000e+00 : f32
      %171 = vector.broadcast %cst_55 : f32 to vector<8x128xf32>
      %172 = arith.cmpf olt, %131, %171 : vector<8x128xf32>
      %173 = math.ceil %131 : vector<8x128xf32>
      %174 = math.floor %131 : vector<8x128xf32>
      %175 = arith.select %172, %173, %174 : vector<8x128xi1>, vector<8x128xf32>
      %176 = arith.subf %170, %175 : vector<8x128xf32>
      %177 = math.absf %176 : vector<8x128xf32>
      %cst_56 = arith.constant 1.000000e+00 : f32
      %178 = vector.broadcast %cst_56 : f32 to vector<8x128xf32>
      %179 = arith.cmpf olt, %177, %178 : vector<8x128xf32>
      %cst_57 = arith.constant 5.000000e-01 : f32
      %180 = vector.broadcast %cst_57 : f32 to vector<8x128xf32>
      %181 = arith.mulf %180, %176 : vector<8x128xf32>
      %182 = arith.mulf %181, %176 : vector<8x128xf32>
      %cst_58 = arith.constant 5.000000e-01 : f32
      %183 = vector.broadcast %cst_58 : f32 to vector<8x128xf32>
      %184 = arith.subf %177, %183 : vector<8x128xf32>
      %185 = arith.select %179, %182, %184 : vector<8x128xi1>, vector<8x128xf32>
      %cst_59 = arith.constant 0.000000e+00 : f32
      %186 = vector.broadcast %cst_59 : f32 to vector<8x128xf32>
      %187 = arith.select %113, %185, %186 : vector<8x128xi1>, vector<8x128xf32>
      %188 = vector.shape_cast %187 : vector<8x128xf32> to vector<1x8x128xf32>
      %cst_60 = arith.constant dense<0.000000e+00> : vector<1xf32>
      %189 = vector.multi_reduction <add>, %188, %cst_60 [1, 2] : vector<1x8x128xf32> to vector<1xf32>
      %190 = vector.shape_cast %189 : vector<1xf32> to vector<1x1x1xf32>
      %191 = vector.extract %190[0, 0, 0] : f32 from vector<1x1x1xf32>
      %192 = arith.addf %168, %191 : f32
      %193 = vector.extract_strided_slice %144 {offsets = [2, 0, 0], sizes = [1, 8, 128], strides = [1, 1, 1]} : vector<4x8x128xf32> to vector<1x8x128xf32>
      %194 = vector.shape_cast %193 : vector<1x8x128xf32> to vector<8x128xf32>
      %cst_61 = arith.constant 0.000000e+00 : f32
      %195 = vector.broadcast %cst_61 : f32 to vector<8x128xf32>
      %196 = arith.cmpf olt, %137, %195 : vector<8x128xf32>
      %197 = math.ceil %137 : vector<8x128xf32>
      %198 = math.floor %137 : vector<8x128xf32>
      %199 = arith.select %196, %197, %198 : vector<8x128xi1>, vector<8x128xf32>
      %200 = arith.subf %194, %199 : vector<8x128xf32>
      %201 = math.absf %200 : vector<8x128xf32>
      %cst_62 = arith.constant 1.000000e+00 : f32
      %202 = vector.broadcast %cst_62 : f32 to vector<8x128xf32>
      %203 = arith.cmpf olt, %201, %202 : vector<8x128xf32>
      %cst_63 = arith.constant 5.000000e-01 : f32
      %204 = vector.broadcast %cst_63 : f32 to vector<8x128xf32>
      %205 = arith.mulf %204, %200 : vector<8x128xf32>
      %206 = arith.mulf %205, %200 : vector<8x128xf32>
      %cst_64 = arith.constant 5.000000e-01 : f32
      %207 = vector.broadcast %cst_64 : f32 to vector<8x128xf32>
      %208 = arith.subf %201, %207 : vector<8x128xf32>
      %209 = arith.select %203, %206, %208 : vector<8x128xi1>, vector<8x128xf32>
      %cst_65 = arith.constant 0.000000e+00 : f32
      %210 = vector.broadcast %cst_65 : f32 to vector<8x128xf32>
      %211 = arith.select %113, %209, %210 : vector<8x128xi1>, vector<8x128xf32>
      %212 = vector.shape_cast %211 : vector<8x128xf32> to vector<1x8x128xf32>
      %cst_66 = arith.constant dense<0.000000e+00> : vector<1xf32>
      %213 = vector.multi_reduction <add>, %212, %cst_66 [1, 2] : vector<1x8x128xf32> to vector<1xf32>
      %214 = vector.shape_cast %213 : vector<1xf32> to vector<1x1x1xf32>
      %215 = vector.extract %214[0, 0, 0] : f32 from vector<1x1x1xf32>
      %216 = arith.addf %192, %215 : f32
      %217 = vector.extract_strided_slice %144 {offsets = [3, 0, 0], sizes = [1, 8, 128], strides = [1, 1, 1]} : vector<4x8x128xf32> to vector<1x8x128xf32>
      %218 = vector.shape_cast %217 : vector<1x8x128xf32> to vector<8x128xf32>
      %cst_67 = arith.constant 0.000000e+00 : f32
      %219 = vector.broadcast %cst_67 : f32 to vector<8x128xf32>
      %220 = arith.cmpf olt, %143, %219 : vector<8x128xf32>
      %221 = math.ceil %143 : vector<8x128xf32>
      %222 = math.floor %143 : vector<8x128xf32>
      %223 = arith.select %220, %221, %222 : vector<8x128xi1>, vector<8x128xf32>
      %224 = arith.subf %218, %223 : vector<8x128xf32>
      %225 = math.absf %224 : vector<8x128xf32>
      %cst_68 = arith.constant 1.000000e+00 : f32
      %226 = vector.broadcast %cst_68 : f32 to vector<8x128xf32>
      %227 = arith.cmpf olt, %225, %226 : vector<8x128xf32>
      %cst_69 = arith.constant 5.000000e-01 : f32
      %228 = vector.broadcast %cst_69 : f32 to vector<8x128xf32>
      %229 = arith.mulf %228, %224 : vector<8x128xf32>
      %230 = arith.mulf %229, %224 : vector<8x128xf32>
      %cst_70 = arith.constant 5.000000e-01 : f32
      %231 = vector.broadcast %cst_70 : f32 to vector<8x128xf32>
      %232 = arith.subf %225, %231 : vector<8x128xf32>
      %233 = arith.select %227, %230, %232 : vector<8x128xi1>, vector<8x128xf32>
      %cst_71 = arith.constant 0.000000e+00 : f32
      %234 = vector.broadcast %cst_71 : f32 to vector<8x128xf32>
      %235 = arith.select %113, %233, %234 : vector<8x128xi1>, vector<8x128xf32>
      %236 = vector.shape_cast %235 : vector<8x128xf32> to vector<1x8x128xf32>
      %cst_72 = arith.constant dense<0.000000e+00> : vector<1xf32>
      %237 = vector.multi_reduction <add>, %236, %cst_72 [1, 2] : vector<1x8x128xf32> to vector<1xf32>
      %238 = vector.shape_cast %237 : vector<1xf32> to vector<1x1x1xf32>
      %239 = vector.extract %238[0, 0, 0] : f32 from vector<1x1x1xf32>
      %240 = arith.addf %216, %239 : f32
      %c0_73 = arith.constant 0 : index
      %c0_74 = arith.constant 0 : index
      %241 = vector.load %arg10[%c0_73, %c0_74] : memref<8x128xi32, #tpu.memory_space<vmem>>, vector<8x128xi32>
      tpu.vector_store %arg10[%c0_73, %c0_74], %111 {strides = array<i32>} : memref<8x128xi32, #tpu.memory_space<vmem>>, vector<8x128xi32>,
      %cst_75 = arith.constant -1.000000e+30 : f32
      %242 = vector.broadcast %cst_75 : f32 to vector<8x128xf32>
      %c0_76 = arith.constant 0 : index
      %c0_77 = arith.constant 0 : index
      %243 = vector.load %arg7[%c0_76, %c0_77] : memref<8x128xf32, #tpu.memory_space<vmem>>, vector<8x128xf32>
      tpu.vector_store %arg7[%c0_76, %c0_77], %242 {strides = array<i32>} : memref<8x128xf32, #tpu.memory_space<vmem>>, vector<8x128xf32>,
      %cst_78 = arith.constant 0.000000e+00 : f32
      %244 = vector.broadcast %cst_78 : f32 to vector<8x128xf32>
      %c0_79 = arith.constant 0 : index
      %c0_80 = arith.constant 0 : index
      %245 = vector.load %arg8[%c0_79, %c0_80] : memref<8x128xf32, #tpu.memory_space<vmem>>, vector<8x128xf32>
      tpu.vector_store %arg8[%c0_79, %c0_80], %244 {strides = array<i32>} : memref<8x128xf32, #tpu.memory_space<vmem>>, vector<8x128xf32>,
      %cst_81 = arith.constant 0.000000e+00 : f32
      %246 = vector.broadcast %cst_81 : f32 to vector<8x128xf32>
      %c0_82 = arith.constant 0 : index
      %c0_83 = arith.constant 0 : index
      %247 = vector.load %arg9[%c0_82, %c0_83] : memref<8x128xf32, #tpu.memory_space<vmem>>, vector<8x128xf32>
      tpu.vector_store %arg9[%c0_82, %c0_83], %246 {strides = array<i32>} : memref<8x128xf32, #tpu.memory_space<vmem>>, vector<8x128xf32>,
      %c0_i32_84 = arith.constant 0 : i32
      %248 = vector.broadcast %c0_i32_84 : i32 to vector<8x128xi32>
      %249 = arith.cmpi eq, %10, %248 : vector<8x128xi32>
      %cst_85 = arith.constant 0.000000e+00 : f32
      %250 = vector.broadcast %240 : f32 to vector<8x128xf32>
      %251 = vector.broadcast %cst_85 : f32 to vector<8x128xf32>
      %252 = arith.select %249, %250, %251 : vector<8x128xi1>, vector<8x128xf32>
      %c0_86 = arith.constant 0 : index
      %c0_87 = arith.constant 0 : index
      %c0_88 = arith.constant 0 : index
      %253 = vector.load %arg6[%c0_86, %c0_87, %c0_88] : memref<1x8x128xf32, #tpu.memory_space<vmem>>, vector<1x8x128xf32>
      %254 = vector.shape_cast %253 : vector<1x8x128xf32> to vector<8x128xf32>
      %255 = vector.shape_cast %252 : vector<8x128xf32> to vector<1x8x128xf32>
      tpu.vector_store %arg6[%c0_86, %c0_87, %c0_88], %255 {strides = array<i32>} : memref<1x8x128xf32, #tpu.memory_space<vmem>>, vector<1x8x128xf32>,
    } else {
    }
    %c0_2 = arith.constant 0 : index
    %c0_3 = arith.constant 0 : index
    %c0_4 = arith.constant 0 : index
    %14 = vector.load %arg5[%c0_2, %c0_3, %c0_4] : memref<8x8x128xf32, #tpu.memory_space<vmem>>, vector<8x8x128xf32>
    %cst = arith.constant dense<0xFF800000> : vector<8x128xf32>
    %15 = vector.multi_reduction <maximumf>, %14, %cst [0] : vector<8x8x128xf32> to vector<8x128xf32>
    %c0_5 = arith.constant 0 : index
    %c0_6 = arith.constant 0 : index
    %16 = vector.load %arg7[%c0_5, %c0_6] : memref<8x128xf32, #tpu.memory_space<vmem>>, vector<8x128xf32>
    %17 = arith.maximumf %16, %15 : vector<8x128xf32>
    %c0_7 = arith.constant 0 : index
    %c0_8 = arith.constant 0 : index
    %18 = vector.load %arg8[%c0_7, %c0_8] : memref<8x128xf32, #tpu.memory_space<vmem>>, vector<8x128xf32>
    %19 = arith.subf %16, %17 : vector<8x128xf32>
    %20 = math.exp %19 : vector<8x128xf32>
    %21 = arith.mulf %18, %20 : vector<8x128xf32>
    %22 = vector.shape_cast %17 : vector<8x128xf32> to vector<1x8x128xf32>
    %23 = vector.broadcast %22 : vector<1x8x128xf32> to vector<8x8x128xf32>
    %24 = arith.subf %14, %23 : vector<8x8x128xf32>
    %25 = math.exp %24 : vector<8x8x128xf32>
    %cst_9 = arith.constant dense<0.000000e+00> : vector<8x128xf32>
    %26 = vector.multi_reduction <add>, %25, %cst_9 [0] : vector<8x8x128xf32> to vector<8x128xf32>
    %27 = arith.addf %21, %26 : vector<8x128xf32>
    %c0_10 = arith.constant 0 : index
    %c0_11 = arith.constant 0 : index
    %28 = vector.load %arg8[%c0_10, %c0_11] : memref<8x128xf32, #tpu.memory_space<vmem>>, vector<8x128xf32>
    tpu.vector_store %arg8[%c0_10, %c0_11], %27 {strides = array<i32>} : memref<8x128xf32, #tpu.memory_space<vmem>>, vector<8x128xf32>,
    %c0_12 = arith.constant 0 : index
    %c0_13 = arith.constant 0 : index
    %29 = vector.load %arg7[%c0_12, %c0_13] : memref<8x128xf32, #tpu.memory_space<vmem>>, vector<8x128xf32>
    tpu.vector_store %arg7[%c0_12, %c0_13], %17 {strides = array<i32>} : memref<8x128xf32, #tpu.memory_space<vmem>>, vector<8x128xf32>,
    %c0_14 = arith.constant 0 : index
    %c0_15 = arith.constant 0 : index
    %30 = vector.load %arg10[%c0_14, %c0_15] : memref<8x128xi32, #tpu.memory_space<vmem>>, vector<8x128xi32>
    %c0_16 = arith.constant 0 : index
    %c0_17 = arith.constant 0 : index
    %31 = vector.load %arg9[%c0_16, %c0_17] : memref<8x128xf32, #tpu.memory_space<vmem>>, vector<8x128xf32>
    %c8_i32 = arith.constant 8 : i32
    %32 = arith.muli %arg1, %c8_i32 : i32
    %c0_i32_18 = arith.constant 0 : i32
    %33 = arith.addi %32, %c0_i32_18 : i32
    %34 = vector.broadcast %33 : i32 to vector<8x128xi32>
    %35 = arith.cmpi eq, %30, %34 : vector<8x128xi32>
    %36 = vector.extract_strided_slice %14 {offsets = [0, 0, 0], sizes = [1, 8, 128], strides = [1, 1, 1]} : vector<8x8x128xf32> to vector<1x8x128xf32>
    %37 = vector.shape_cast %36 : vector<1x8x128xf32> to vector<8x128xf32>
    %cst_19 = arith.constant 0.000000e+00 : f32
    %38 = vector.broadcast %cst_19 : f32 to vector<8x128xf32>
    %39 = arith.select %35, %37, %38 : vector<8x128xi1>, vector<8x128xf32>
    %40 = arith.addf %31, %39 : vector<8x128xf32>
    %c1_i32 = arith.constant 1 : i32
    %41 = arith.addi %32, %c1_i32 : i32
    %42 = vector.broadcast %41 : i32 to vector<8x128xi32>
    %43 = arith.cmpi eq, %30, %42 : vector<8x128xi32>
    %44 = vector.extract_strided_slice %14 {offsets = [1, 0, 0], sizes = [1, 8, 128], strides = [1, 1, 1]} : vector<8x8x128xf32> to vector<1x8x128xf32>
    %45 = vector.shape_cast %44 : vector<1x8x128xf32> to vector<8x128xf32>
    %cst_20 = arith.constant 0.000000e+00 : f32
    %46 = vector.broadcast %cst_20 : f32 to vector<8x128xf32>
    %47 = arith.select %43, %45, %46 : vector<8x128xi1>, vector<8x128xf32>
    %48 = arith.addf %40, %47 : vector<8x128xf32>
    %c2_i32 = arith.constant 2 : i32
    %49 = arith.addi %32, %c2_i32 : i32
    %50 = vector.broadcast %49 : i32 to vector<8x128xi32>
    %51 = arith.cmpi eq, %30, %50 : vector<8x128xi32>
    %52 = vector.extract_strided_slice %14 {offsets = [2, 0, 0], sizes = [1, 8, 128], strides = [1, 1, 1]} : vector<8x8x128xf32> to vector<1x8x128xf32>
    %53 = vector.shape_cast %52 : vector<1x8x128xf32> to vector<8x128xf32>
    %cst_21 = arith.constant 0.000000e+00 : f32
    %54 = vector.broadcast %cst_21 : f32 to vector<8x128xf32>
    %55 = arith.select %51, %53, %54 : vector<8x128xi1>, vector<8x128xf32>
    %56 = arith.addf %48, %55 : vector<8x128xf32>
    %c3_i32 = arith.constant 3 : i32
    %57 = arith.addi %32, %c3_i32 : i32
    %58 = vector.broadcast %57 : i32 to vector<8x128xi32>
    %59 = arith.cmpi eq, %30, %58 : vector<8x128xi32>
    %60 = vector.extract_strided_slice %14 {offsets = [3, 0, 0], sizes = [1, 8, 128], strides = [1, 1, 1]} : vector<8x8x128xf32> to vector<1x8x128xf32>
    %61 = vector.shape_cast %60 : vector<1x8x128xf32> to vector<8x128xf32>
    %cst_22 = arith.constant 0.000000e+00 : f32
    %62 = vector.broadcast %cst_22 : f32 to vector<8x128xf32>
    %63 = arith.select %59, %61, %62 : vector<8x128xi1>, vector<8x128xf32>
    %64 = arith.addf %56, %63 : vector<8x128xf32>
    %c4_i32 = arith.constant 4 : i32
    %65 = arith.addi %32, %c4_i32 : i32
    %66 = vector.broadcast %65 : i32 to vector<8x128xi32>
    %67 = arith.cmpi eq, %30, %66 : vector<8x128xi32>
    %68 = vector.extract_strided_slice %14 {offsets = [4, 0, 0], sizes = [1, 8, 128], strides = [1, 1, 1]} : vector<8x8x128xf32> to vector<1x8x128xf32>
    %69 = vector.shape_cast %68 : vector<1x8x128xf32> to vector<8x128xf32>
    %cst_23 = arith.constant 0.000000e+00 : f32
    %70 = vector.broadcast %cst_23 : f32 to vector<8x128xf32>
    %71 = arith.select %67, %69, %70 : vector<8x128xi1>, vector<8x128xf32>
    %72 = arith.addf %64, %71 : vector<8x128xf32>
    %c5_i32 = arith.constant 5 : i32
    %73 = arith.addi %32, %c5_i32 : i32
    %74 = vector.broadcast %73 : i32 to vector<8x128xi32>
    %75 = arith.cmpi eq, %30, %74 : vector<8x128xi32>
    %76 = vector.extract_strided_slice %14 {offsets = [5, 0, 0], sizes = [1, 8, 128], strides = [1, 1, 1]} : vector<8x8x128xf32> to vector<1x8x128xf32>
    %77 = vector.shape_cast %76 : vector<1x8x128xf32> to vector<8x128xf32>
    %cst_24 = arith.constant 0.000000e+00 : f32
    %78 = vector.broadcast %cst_24 : f32 to vector<8x128xf32>
    %79 = arith.select %75, %77, %78 : vector<8x128xi1>, vector<8x128xf32>
    %80 = arith.addf %72, %79 : vector<8x128xf32>
    %c6_i32 = arith.constant 6 : i32
    %81 = arith.addi %32, %c6_i32 : i32
    %82 = vector.broadcast %81 : i32 to vector<8x128xi32>
    %83 = arith.cmpi eq, %30, %82 : vector<8x128xi32>
    %84 = vector.extract_strided_slice %14 {offsets = [6, 0, 0], sizes = [1, 8, 128], strides = [1, 1, 1]} : vector<8x8x128xf32> to vector<1x8x128xf32>
    %85 = vector.shape_cast %84 : vector<1x8x128xf32> to vector<8x128xf32>
    %cst_25 = arith.constant 0.000000e+00 : f32
    %86 = vector.broadcast %cst_25 : f32 to vector<8x128xf32>
    %87 = arith.select %83, %85, %86 : vector<8x128xi1>, vector<8x128xf32>
    %88 = arith.addf %80, %87 : vector<8x128xf32>
    %c7_i32 = arith.constant 7 : i32
    %89 = arith.addi %32, %c7_i32 : i32
    %90 = vector.broadcast %89 : i32 to vector<8x128xi32>
    %91 = arith.cmpi eq, %30, %90 : vector<8x128xi32>
    %92 = vector.extract_strided_slice %14 {offsets = [7, 0, 0], sizes = [1, 8, 128], strides = [1, 1, 1]} : vector<8x8x128xf32> to vector<1x8x128xf32>
    %93 = vector.shape_cast %92 : vector<1x8x128xf32> to vector<8x128xf32>
    %cst_26 = arith.constant 0.000000e+00 : f32
    %94 = vector.broadcast %cst_26 : f32 to vector<8x128xf32>
    %95 = arith.select %91, %93, %94 : vector<8x128xi1>, vector<8x128xf32>
    %96 = arith.addf %88, %95 : vector<8x128xf32>
    %c0_27 = arith.constant 0 : index
    %c0_28 = arith.constant 0 : index
    %97 = vector.load %arg9[%c0_27, %c0_28] : memref<8x128xf32, #tpu.memory_space<vmem>>, vector<8x128xf32>
    tpu.vector_store %arg9[%c0_27, %c0_28], %96 {strides = array<i32>} : memref<8x128xf32, #tpu.memory_space<vmem>>, vector<8x128xf32>,
    %c0_i32_29 = arith.constant 0 : i32
    %98 = arith.cmpi eq, %arg1, %c0_i32_29 : i32
    %99 = arith.extui %98 : i1 to i32
    %c0_i32_30 = arith.constant 0 : i32
    %100 = arith.cmpi ne, %99, %c0_i32_30 : i32
    scf.if %100 {
      %c0_31 = arith.constant 0 : index
      %c0_32 = arith.constant 0 : index
      %101 = vector.load %arg10[%c0_31, %c0_32] : memref<8x128xi32, #tpu.memory_space<vmem>>, vector<8x128xi32>
      %c0_i32_33 = arith.constant 0 : i32
      %102 = vector.broadcast %c0_i32_33 : i32 to vector<8x128xi32>
      %103 = arith.cmpi sgt, %101, %102 : vector<8x128xi32>
      %c0_34 = arith.constant 0 : index
      %c0_35 = arith.constant 0 : index
      %104 = vector.load %arg7[%c0_34, %c0_35] : memref<8x128xf32, #tpu.memory_space<vmem>>, vector<8x128xf32>
      %c0_36 = arith.constant 0 : index
      %c0_37 = arith.constant 0 : index
      %105 = vector.load %arg8[%c0_36, %c0_37] : memref<8x128xf32, #tpu.memory_space<vmem>>, vector<8x128xf32>
      %106 = math.log %105 : vector<8x128xf32>
      %107 = arith.addf %104, %106 : vector<8x128xf32>
      %c0_38 = arith.constant 0 : index
      %c0_39 = arith.constant 0 : index
      %108 = vector.load %arg9[%c0_38, %c0_39] : memref<8x128xf32, #tpu.memory_space<vmem>>, vector<8x128xf32>
      %109 = arith.subf %107, %108 : vector<8x128xf32>
      %110 = arith.extui %103 : vector<8x128xi1> to vector<8x128xi32>
      %111 = arith.sitofp %110 : vector<8x128xi32> to vector<8x128xf32>
      %cst_40 = arith.constant dense<0.000000e+00> : vector<8xf32>
      %112 = vector.multi_reduction <add>, %111, %cst_40 [1] : vector<8x128xf32> to vector<8xf32>
      %113 = vector.shape_cast %112 : vector<8xf32> to vector<8x1xf32>
      %cst_41 = arith.constant 3.000000e+00 : f32
      %114 = vector.broadcast %cst_41 : f32 to vector<8x1xf32>
      %115 = arith.mulf %113, %114 : vector<8x1xf32>
      %cst_42 = arith.constant 1.280000e+02 : f32
      %116 = vector.broadcast %cst_42 : f32 to vector<8x1xf32>
      %117 = arith.minimumf %115, %116 : vector<8x1xf32>
      %cst_43 = arith.constant 0.000000e+00 : f32
      %118 = vector.broadcast %cst_43 : f32 to vector<8x128xf32>
      %119 = arith.select %103, %109, %118 : vector<8x128xi1>, vector<8x128xf32>
      %120 = vector.shape_cast %119 : vector<8x128xf32> to vector<1x8x128xf32>
      %cst_44 = arith.constant dense<0.000000e+00> : vector<1xf32>
      %121 = vector.multi_reduction <add>, %120, %cst_44 [1, 2] : vector<1x8x128xf32> to vector<1xf32>
      %122 = vector.shape_cast %121 : vector<1xf32> to vector<1x1x1xf32>
      %123 = vector.extract %122[0, 0, 0] : f32 from vector<1x1x1xf32>
      %cst_45 = arith.constant 0.000000e+00 : f32
      %124 = vector.broadcast %cst_45 : f32 to vector<8x128xf32>
      %125 = arith.select %103, %124, %109 : vector<8x128xi1>, vector<8x128xf32>
      %cst_46 = arith.constant dense<0xFF800000> : vector<8xf32>
      %126 = vector.multi_reduction <maximumf>, %125, %cst_46 [1] : vector<8x128xf32> to vector<8xf32>
      %127 = vector.shape_cast %126 : vector<8xf32> to vector<8x1xf32>
      %cst_47 = arith.constant 1.000000e+00 : f32
      %128 = vector.broadcast %cst_47 : f32 to vector<8x1xf32>
      %129 = arith.addf %127, %128 : vector<8x1xf32>
      %cst_48 = arith.constant 0.000000e+00 : f32
      %130 = vector.broadcast %cst_48 : f32 to vector<8x1xf32>
      %c0_i32_49 = arith.constant 0 : i32
      %c30_i32 = arith.constant 30 : i32
      %131 = arith.addi %c0_i32_49, %c30_i32 : i32
      %c1_i32_50 = arith.constant 1 : i32
      %132:2 = scf.for %arg11 = %c0_i32_49 to %131 step %c1_i32_50 iter_args(%arg12 = %130, %arg13 = %129) -> (vector<8x1xf32>, vector<8x1xf32>)  : i32 {
        %172 = arith.addf %arg12, %arg13 : vector<8x1xf32>
        %cst_66 = arith.constant 5.000000e-01 : f32
        %173 = vector.broadcast %cst_66 : f32 to vector<8x1xf32>
        %174 = arith.mulf %173, %172 : vector<8x1xf32>
        %175 = vector.broadcast %174 : vector<8x1xf32> to vector<8x128xf32>
        %176 = arith.cmpf oge, %125, %175 : vector<8x128xf32>
        %177 = arith.extui %176 : vector<8x128xi1> to vector<8x128xi32>
        %178 = arith.sitofp %177 : vector<8x128xi32> to vector<8x128xf32>
        %cst_67 = arith.constant dense<0.000000e+00> : vector<8xf32>
        %179 = vector.multi_reduction <add>, %178, %cst_67 [1] : vector<8x128xf32> to vector<8xf32>
        %180 = vector.shape_cast %179 : vector<8xf32> to vector<8x1xf32>
        %181 = arith.cmpf oge, %180, %117 : vector<8x1xf32>
        %182 = arith.select %181, %174, %arg12 : vector<8x1xi1>, vector<8x1xf32>
        %183 = arith.select %181, %arg13, %174 : vector<8x1xi1>, vector<8x1xf32>
        scf.yield %182, %183 : vector<8x1xf32>, vector<8x1xf32>
      }
      %133 = vector.broadcast %132#0 : vector<8x1xf32> to vector<8x128xf32>
      %134 = arith.cmpf ogt, %125, %133 : vector<8x128xf32>
      %135 = arith.extui %134 : vector<8x128xi1> to vector<8x128xi32>
      %136 = arith.sitofp %135 : vector<8x128xi32> to vector<8x128xf32>
      %cst_51 = arith.constant dense<0.000000e+00> : vector<8xf32>
      %137 = vector.multi_reduction <add>, %136, %cst_51 [1] : vector<8x128xf32> to vector<8xf32>
      %138 = vector.shape_cast %137 : vector<8xf32> to vector<8x1xf32>
      %cst_52 = arith.constant 0.000000e+00 : f32
      %139 = vector.broadcast %cst_52 : f32 to vector<8x128xf32>
      %140 = arith.select %134, %125, %139 : vector<8x128xi1>, vector<8x128xf32>
      %cst_53 = arith.constant dense<0.000000e+00> : vector<8xf32>
      %141 = vector.multi_reduction <add>, %140, %cst_53 [1] : vector<8x128xf32> to vector<8xf32>
      %142 = vector.shape_cast %141 : vector<8xf32> to vector<8x1xf32>
      %143 = arith.subf %117, %138 : vector<8x1xf32>
      %144 = arith.mulf %143, %132#0 : vector<8x1xf32>
      %145 = arith.addf %142, %144 : vector<8x1xf32>
      %146 = vector.shape_cast %145 : vector<8x1xf32> to vector<1x8x1xf32>
      %cst_54 = arith.constant dense<0.000000e+00> : vector<1xf32>
      %147 = vector.multi_reduction <add>, %146, %cst_54 [1, 2] : vector<1x8x1xf32> to vector<1xf32>
      %148 = vector.shape_cast %147 : vector<1xf32> to vector<1x1x1xf32>
      %149 = vector.extract %148[0, 0, 0] : f32 from vector<1x1x1xf32>
      %150 = arith.addf %123, %149 : f32
      %151 = vector.shape_cast %113 : vector<8x1xf32> to vector<1x8x1xf32>
      %cst_55 = arith.constant dense<0.000000e+00> : vector<1xf32>
      %152 = vector.multi_reduction <add>, %151, %cst_55 [1, 2] : vector<1x8x1xf32> to vector<1xf32>
      %153 = vector.shape_cast %152 : vector<1xf32> to vector<1x1x1xf32>
      %154 = vector.extract %153[0, 0, 0] : f32 from vector<1x1x1xf32>
      %c0_56 = arith.constant 0 : index
      %c0_57 = arith.constant 0 : index
      %c0_58 = arith.constant 0 : index
      %155 = vector.load %arg6[%c0_56, %c0_57, %c0_58] : memref<1x8x128xf32, #tpu.memory_space<vmem>>, vector<1x8x128xf32>
      %156 = vector.shape_cast %155 : vector<1x8x128xf32> to vector<8x128xf32>
      %c1_i32_59 = arith.constant 1 : i32
      %157 = vector.broadcast %c1_i32_59 : i32 to vector<8x128xi32>
      %158 = arith.cmpi eq, %10, %157 : vector<8x128xi32>
      %cst_60 = arith.constant 0.000000e+00 : f32
      %159 = vector.broadcast %150 : f32 to vector<8x128xf32>
      %160 = vector.broadcast %cst_60 : f32 to vector<8x128xf32>
      %161 = arith.select %158, %159, %160 : vector<8x128xi1>, vector<8x128xf32>
      %162 = arith.addf %156, %161 : vector<8x128xf32>
      %c2_i32_61 = arith.constant 2 : i32
      %163 = vector.broadcast %c2_i32_61 : i32 to vector<8x128xi32>
      %164 = arith.cmpi eq, %10, %163 : vector<8x128xi32>
      %cst_62 = arith.constant 0.000000e+00 : f32
      %165 = vector.broadcast %154 : f32 to vector<8x128xf32>
      %166 = vector.broadcast %cst_62 : f32 to vector<8x128xf32>
      %167 = arith.select %164, %165, %166 : vector<8x128xi1>, vector<8x128xf32>
      %168 = arith.addf %162, %167 : vector<8x128xf32>
      %c0_63 = arith.constant 0 : index
      %c0_64 = arith.constant 0 : index
      %c0_65 = arith.constant 0 : index
      %169 = vector.load %arg6[%c0_63, %c0_64, %c0_65] : memref<1x8x128xf32, #tpu.memory_space<vmem>>, vector<1x8x128xf32>
      %170 = vector.shape_cast %169 : vector<1x8x128xf32> to vector<8x128xf32>
      %171 = vector.shape_cast %168 : vector<8x128xf32> to vector<1x8x128xf32>
      tpu.vector_store %arg6[%c0_63, %c0_64, %c0_65], %171 {strides = array<i32>} : memref<1x8x128xf32, #tpu.memory_space<vmem>>, vector<1x8x128xf32>,
    } else {
    }
    return
  }
  func.func @transform_0(%arg0: i32, %arg1: i32) -> (i32, i32, i32) {
    %c0_i32 = arith.constant 0 : i32
    %c0_i32_0 = arith.constant 0 : i32
    %c0_i32_1 = arith.constant 0 : i32
    return %c0_i32, %arg0, %c0_i32_0 : i32, i32, i32
  }
  func.func @transform_1(%arg0: i32, %arg1: i32) -> (i32, i32) {
    %c0_i32 = arith.constant 0 : i32
    %c0_i32_0 = arith.constant 0 : i32
    %c0_i32_1 = arith.constant 0 : i32
    return %c0_i32, %c0_i32_0 : i32, i32
  }
  func.func @transform_2(%arg0: i32, %arg1: i32) -> (i32, i32, i32) {
    %c0_i32 = arith.constant 0 : i32
    %c0_i32_0 = arith.constant 0 : i32
    %c0_i32_1 = arith.constant 0 : i32
    return %c0_i32, %arg0, %c0_i32_0 : i32, i32, i32
  }
  func.func @transform_3(%arg0: i32, %arg1: i32) -> (i32, i32, i32) {
    %c0_i32 = arith.constant 0 : i32
    %c0_i32_0 = arith.constant 0 : i32
    return %arg1, %arg0, %c0_i32 : i32, i32, i32
  }
  func.func @transform_4(%arg0: i32, %arg1: i32) -> (i32, i32, i32) {
    %c0_i32 = arith.constant 0 : i32
    %c0_i32_0 = arith.constant 0 : i32
    %c0_i32_1 = arith.constant 0 : i32
    return %arg0, %c0_i32, %c0_i32_0 : i32, i32, i32
  }
}

</mosaic_0001>

<llo_original>
// kernel: tpu_custom_call.1
$region0: #{tpu_custom_call.1}
  #allocation0 [shape = 'u32[]', space=smem, size = 0x4, offset = 0x4, fixed_abs, tag = 'smem constant byte address 0x4 - core index']
  #allocation1 [shape = 'u32[72,128]{1,0:T(1,128)}', space=vmem, size = 0x9000, scoped, tag = 'internal scratch']
  #allocation2 [shape = 'f32[8,128]{1,0:T(8,128)}', space=vmem, size = 0x1000, scoped, tag = 'scratch operand']
  #allocation3 [shape = 'f32[8,128]{1,0:T(8,128)}', space=vmem, size = 0x1000, scoped, tag = 'scratch operand']
  #allocation4 [shape = 'f32[8,128]{1,0:T(8,128)}', space=vmem, size = 0x1000, scoped, tag = 'scratch operand']
  #allocation5 [shape = 's32[8,128]{1,0:T(8,128)}', space=vmem, size = 0x1000, scoped, tag = 'scratch operand']
  %s0 = inlined_call_operand.hbm [shape: f32[4,8,8], index: 0, kind: input, shape index: {}]
  %s1 = inlined_call_operand.hbm [shape: f32[8,128], index: 1, kind: input, shape index: {}]
  %s2 = inlined_call_operand.hbm [shape: f32[4,8,128], index: 2, kind: input, shape index: {}]
  %s3 = inlined_call_operand.hbm [shape: f32[8,8,128], index: 3, kind: input, shape index: {}]
  %s4 = inlined_call_operand.hbm [shape: f32[1,8,128], index: 4, kind: output, shape index: {}]
  %s5 = sld [smem:[#allocation0]]
  $region64: #{tpu_custom_call.1} parent=0
    _
  %s7 = ssub.s32 1, %s5
  %s8 = scalar_select 0, %s7, %s5
  $region1: #{tpu_custom_call.1} parent=0
    #allocation6 [shape = 'u8[16384]{0}', space=vmem, size = 0x4000, scoped, tag = 'input window, operand 0, single buffered']
    #allocation7 [shape = 's32[1]{0}', space=sflag, size = 0x4, scoped, tag = 'scoped memory for tpu_custom_call.1']
    #allocation8 [shape = 's32[1]{0}', space=sflag, size = 0x4, scoped, tag = 'scoped memory for tpu_custom_call.1']
    #allocation9 [shape = 'u8[4096]{0}', space=vmem, size = 0x1000, scoped, tag = 'input window, operand 1, single buffered']
    #allocation10 [shape = 's32[1]{0}', space=sflag, size = 0x4, scoped, tag = 'scoped memory for tpu_custom_call.1']
    #allocation11 [shape = 'u8[16384]{0}', space=vmem, size = 0x4000, scoped, tag = 'input window, operand 2, single buffered']
    #allocation12 [shape = 'u8[32768]{0}', space=vmem, size = 0x8000, scoped, tag = 'input window, operand 3, single buffered']
    #allocation13 [shape = 's32[1]{0}', space=sflag, size = 0x4, scoped, tag = 'scoped memory for tpu_custom_call.1']
    #allocation14 [shape = 'u8[4096]{0}', space=vmem, size = 0x1000, scoped, tag = 'output window, operand 0, single buffered']
    %9 = vsyncpa [#allocation7], 0
    %10 = vsyncpa [#allocation10], 0
    %11 = vsyncpa [#allocation13], 0
    %12 = vsyncpa [#allocation8], 0
    // Predicated region
    $region2: #{tpu_custom_call.1} parent=1 // pred_check
      _
    $region3: #{tpu_custom_call.1} parent=1 // pred_check_branch
      %14 = sbr.rel (0) target = $region5
    $region4: #{tpu_custom_call.1} parent=1 // pred_region
      %16 = vsyncadd [#allocation7], 0
      %s17 = sshll.u32 %s0, 4
      %s18 = int_to_ptr.hbm [resolvable:$true] %s17
      %s19 = sshll.u32 [#allocation6], 4
      %s20 = int_to_ptr.vmem [resolvable:$true] %s19
      %25 = dma.hbm_to_vmem [thread:$0]  %s18, 512, %s20, [#allocation7], 128, 128, 8
    $region5: #{tpu_custom_call.1} parent=1 // pred_fallthru
      _
    // Predicated region
    $region6: #{tpu_custom_call.1} parent=1 // pred_check
      _
    $region7: #{tpu_custom_call.1} parent=1 // pred_check_branch
      %27 = sbr.rel (0) target = $region9
    $region8: #{tpu_custom_call.1} parent=1 // pred_region
      %29 = vsyncadd [#allocation10], 0
      %s31 = sshll.u32 %s1, 4
      %s32 = int_to_ptr.hbm [resolvable:$true] %s31
      %s33 = sshll.u32 [#allocation9], 4
      %s34 = int_to_ptr.vmem [resolvable:$true] %s33
      %36 = dma.hbm_to_vmem [thread:$0]  %s32, 128, %s34, [#allocation10]
    $region9: #{tpu_custom_call.1} parent=1 // pred_fallthru
      _
    // Predicated region
    $region10: #{tpu_custom_call.1} parent=1 // pred_check
      _
    $region11: #{tpu_custom_call.1} parent=1 // pred_check_branch
      %38 = sbr.rel (0) target = $region13
    $region12: #{tpu_custom_call.1} parent=1 // pred_region
      %40 = vsyncadd [#allocation10], 0
      %s41 = sshll.u32 %s2, 4
      %s42 = int_to_ptr.hbm [resolvable:$true] %s41
      %s43 = sshll.u32 [#allocation11], 4
      %s44 = int_to_ptr.vmem [resolvable:$true] %s43
      %49 = dma.hbm_to_vmem [thread:$0]  %s42, 512, %s44, [#allocation10], 128, 128, 8
    $region13: #{tpu_custom_call.1} parent=1 // pred_fallthru
      _
    // Predicated region
    $region14: #{tpu_custom_call.1} parent=1 // pred_check
      _
    $region15: #{tpu_custom_call.1} parent=1 // pred_check_branch
      %51 = sbr.rel (0) target = $region17
    $region16: #{tpu_custom_call.1} parent=1 // pred_region
      %53 = vsyncadd [#allocation13], 0
      %s54 = sshll.u32 %s3, 4
      %s55 = int_to_ptr.hbm [resolvable:$true] %s54
      %s56 = sshll.u32 [#allocation12], 4
      %s57 = int_to_ptr.vmem [resolvable:$true] %s56
      %62 = dma.hbm_to_vmem [thread:$0]  %s55, 1024, %s57, [#allocation13], 128, 128, 8
    $region17: #{tpu_custom_call.1} parent=1 // pred_fallthru
      _
    // Predicated region
    $region18: #{tpu_custom_call.1} parent=1 // pred_check
      _
    $region19: #{tpu_custom_call.1} parent=1 // pred_check_branch
      %64 = sbr.rel (0) target = $region21
    $region20: #{tpu_custom_call.1} parent=1 // pred_region
      %66 = dma.done [#allocation7], 512
    $region21: #{tpu_custom_call.1} parent=1 // pred_fallthru
      _
    // Predicated region
    $region22: #{tpu_custom_call.1} parent=1 // pred_check
      _
    $region23: #{tpu_custom_call.1} parent=1 // pred_check_branch
      %68 = sbr.rel (0) target = $region25
    $region24: #{tpu_custom_call.1} parent=1 // pred_region
      %70 = dma.done [#allocation10], 128
    $region25: #{tpu_custom_call.1} parent=1 // pred_fallthru
      _
    // Predicated region
    $region26: #{tpu_custom_call.1} parent=1 // pred_check
      _
    $region27: #{tpu_custom_call.1} parent=1 // pred_check_branch
      %72 = sbr.rel (0) target = $region29
    $region28: #{tpu_custom_call.1} parent=1 // pred_region
      %74 = dma.done [#allocation10], 512
    $region29: #{tpu_custom_call.1} parent=1 // pred_fallthru
      _
    // Predicated region
    $region30: #{tpu_custom_call.1} parent=1 // pred_check
      _
    $region31: #{tpu_custom_call.1} parent=1 // pred_check_branch
      %76 = sbr.rel (0) target = $region33
    $region32: #{tpu_custom_call.1} parent=1 // pred_region
      %78 = dma.done [#allocation13], 1024
    $region33: #{tpu_custom_call.1} parent=1 // pred_fallthru
      _
    %v79 = vld [vmem:[#allocation9] sm:$0xff]
    %v81 = vrot.slane %v79, 1
    %v83 = vmul.f32 %v79, %v81
    %v84 = vlaneseq
    %v85 = vshrl.u32 %v84, 7
    %p86 = scmp.eq.s32.totalorder 0, 0
    // Predicated region
    $region34: #{tpu_custom_call.1} parent=1 // pred_check
      %p87 = pneg %p86
    $region35: #{tpu_custom_call.1} parent=1 // pred_check_branch
      %89 = sbr.rel (%p87) target = $region37
    $region36: #{tpu_custom_call.1} parent=1 // pred_region
      loop: start=0, step=1, limit=4
      $region38: #{tpu_custom_call.1} parent=36 // loop_pre_header
        _
      $region39: #{tpu_custom_call.1} parent=36 // loop_header
        %s91 = sphi 0, %s95
        %p92 = scmp.ge.s32.totalorder %s91, 4
        %v96 = vphi -1e+30, %v168
        %v97 = vphi 0.0, %v169
        %v98 = vphi 0.0, %v170
        %v99 = vphi 0.0, %v171
        %v100 = vphi 0.0, %v172
        %v101 = vphi 0.0, %v177
      $region40: #{tpu_custom_call.1} parent=36 // loop_header_branch
        %94 = sbr.rel (%p92) target = $region44
      $region41: #{tpu_custom_call.1} parent=36 // loop_body
        %s102 = smul.u32 %s91, 8
        %s103 = scalar_lea.vmem [#allocation6], %s102
        %v104 = vld [vmem:[%s103] sm:$0xff]
        %106 = vset.pattern.permute.xlu0 2
        %107 = vperm.xlu0 %106, %v104
        %v108 = vpop.permute.xlu0 %107
        %v110 = vperm.slane %v79, 2
        %v111 = vmin.f32 %v108, %v110
        %112 = vset.pattern.permute.xlu0 0
        %113 = vperm.xlu0 %112, %v104
        %v114 = vpop.permute.xlu0 %113
        %v116 = vperm.slane %v79, 0
        %v117 = vmax.f32 %v114, %v116
        %v118 = vsub.f32 %v111, %v117
        %v119 = vmax.f32 %v118, 0.0
        %120 = vset.pattern.permute.xlu0 3
        %121 = vperm.xlu0 %120, %v104
        %v122 = vpop.permute.xlu0 %121
        %v124 = vperm.slane %v79, 3
        %v125 = vmin.f32 %v122, %v124
        %126 = vset.pattern.permute.xlu0 1
        %127 = vperm.xlu0 %126, %v104
        %v128 = vpop.permute.xlu0 %127
        %v130 = vperm.slane %v79, 1
        %v131 = vmax.f32 %v128, %v130
        %v132 = vsub.f32 %v125, %v131
        %v133 = vmax.f32 %v132, 0.0
        %v134 = vmul.f32 %v119, %v133
        %135 = vrot.lane.b32.xlu0 %v104, 2
        %v136 = vpop.permute.xlu0 %135
        %v138 = vsub.f32 %v104, %v136
        %140 = vrot.lane.b32.xlu0 %v138, 127
        %v141 = vpop.permute.xlu0 %140
        %v143 = vmul.f32 %v138, %v141
        %145 = vset.pattern.permute.xlu0 2
        %146 = vperm.xlu0 %145, %v143
        %v147 = vpop.permute.xlu0 %146
        %v149 = vperm.slane %v83, 4
        %v150 = vadd.f32 %v147, %v149
        %v151 = vsub.f32 %v150, %v134
        %v152 = vrcp.pop %v151
        %v153 = vmul.f32 %v151, %v152
        %v154 = vsub.f32 1.0, %v153
        %v155 = vmul.f32 %v152, %v154
        %v156 = vadd.f32 %v152, %v155
        %vm157 = vweird.f32 %v151
        %vm158 = vweird.f32 %v152
        %vm159 = vmor %vm157, %vm158
        %v160 = vsel %vm159, %v152, %v156
        %v161 = vand.u32 2147483647, %v151
        %vm162 = vcmp.eq.f32.partialorder %v161, 8.507059e+37
        %v163 = vand.u32 %v151, 2147483648
        %v164 = vor.u32 1.1754944e-38, %v163
        %v165 = vsel %vm162, %v164, %v160
        %v166 = vmul.f32 %v134, %v165
        %vm167 = vcmp.gt.f32.partialorder %v166, %v96
        %v168 = vsel %vm167, %v166, %v96
        %v169 = vsel %vm167, %v114, %v97
        %v170 = vsel %vm167, %v128, %v98
        %v171 = vsel %vm167, %v108, %v99
        %v172 = vsel %vm167, %v122, %v100
        %173 = vset.pattern.permute.xlu0 4
        %174 = vperm.xlu0 %173, %v104
        %v175 = vpop.permute.xlu0 %174
        %v177 = vsel %vm167, %v175, %v101
      $region42: #{tpu_custom_call.1} parent=36 // loop_footer
        %s95 = sadd.s32 1, %s91
      $region43: #{tpu_custom_call.1} parent=36 // loop_footer_branch
        %90 = sbr.rel target = $region39
      $region44: #{tpu_custom_call.1} parent=36 // loop_exit
        _
      %v178 = vadd.f32 %v101, 1.0
      %v179 = vcvt.f32.s32.to.zero.pseudo %v178
      %vm180 = vcmp.lt.f32.partialorder %v96, 0.5
      %v181 = vsel %vm180, 0, %v179
      %vm182 = vcmp.gt.s32.totalorder %v181, 0
      %v183 = vperm.slane %v79, 0
      %v184 = vsub.f32 %v97, %v183
      %v185 = vadd.f32 %v184, %v99
      %v186 = vperm.slane %v79, 2
      %v187 = vsub.f32 %v185, %v186
      %v188 = vmul.f32 %v187, 5.0
      %v189 = vperm.slane %v79, 6
      %v190 = vmul.f32 %v188, %v189
      %v191 = vperm.slane %v79, 1
      %v192 = vsub.f32 %v98, %v191
      %v193 = vadd.f32 %v192, %v100
      %v194 = vperm.slane %v79, 3
      %v195 = vsub.f32 %v193, %v194
      %v196 = vmul.f32 %v195, 5.0
      %v197 = vperm.slane %v79, 7
      %v198 = vmul.f32 %v196, %v197
      %v199 = vsub.f32 %v99, %v97
      %v200 = vmul.f32 %v199, %v189
      %v201 = vlog2.pop %v200
      %v202 = vmul.f32 %v201, 0.6931472
      %v203 = vmul.f32 %v202, 5.0
      %v204 = vsub.f32 %v100, %v98
      %v205 = vmul.f32 %v204, %v197
      %v206 = vlog2.pop %v205
      %v207 = vmul.f32 %v206, 0.6931472
      %v208 = vmul.f32 %v207, 5.0
      %v209 = vld [vmem:[#allocation11] sm:$0xff]
      %v210 = vld [vmem:[#allocation11 + $0x8] sm:$0xff]
      %v211 = vld [vmem:[#allocation11 + $0x10] sm:$0xff]
      %v212 = vld [vmem:[#allocation11 + $0x18] sm:$0xff]
      %vm213 = vcmp.lt.f32.partialorder %v190, 0.0
      %v214 = vceil.f32 %v190
      %v215 = vfloor.f32 %v190
      %v216 = vsel %vm213, %v214, %v215
      %v217 = vsub.f32 %v209, %v216
      %v218 = vand.u32 2147483647, %v217
      %vm219 = vcmp.lt.f32.partialorder %v218, 1.0
      %v220 = vmul.f32 %v217, 0.5
      %v221 = vmul.f32 %v220, %v217
      %v222 = vsub.f32 %v218, 0.5
      %v223 = vsel %vm219, %v221, %v222
      %v224 = vsel %vm182, %v223, 0.0
      %225 = vadd.xlane.f32.xlu0 %v224
      %v226 = vpop.xlane.xlu0 %225
      %v227 = vrot.slane %v226, 4
      %v228 = vadd.f32 %v226, %v227
      %v229 = vrot.slane %v228, 2
      %v230 = vadd.f32 %v228, %v229
      %v231 = vrot.slane %v230, 1
      %v232 = vadd.f32 %v230, %v231
      %s233 = vtos %v232
      %s234 = sadd.f32 %s233, 0.0
      %vm235 = vcmp.lt.f32.partialorder %v198, 0.0
      %v236 = vceil.f32 %v198
      %v237 = vfloor.f32 %v198
      %v238 = vsel %vm235, %v236, %v237
      %v239 = vsub.f32 %v210, %v238
      %v240 = vand.u32 2147483647, %v239
      %vm241 = vcmp.lt.f32.partialorder %v240, 1.0
      %v242 = vmul.f32 %v239, 0.5
      %v243 = vmul.f32 %v242, %v239
      %v244 = vsub.f32 %v240, 0.5
      %v245 = vsel %vm241, %v243, %v244
      %v246 = vsel %vm182, %v245, 0.0
      %247 = vadd.xlane.f32.xlu0 %v246
      %v248 = vpop.xlane.xlu0 %247
      %v249 = vrot.slane %v248, 4
      %v250 = vadd.f32 %v248, %v249
      %v251 = vrot.slane %v250, 2
      %v252 = vadd.f32 %v250, %v251
      %v253 = vrot.slane %v252, 1
      %v254 = vadd.f32 %v252, %v253
      %s255 = vtos %v254
      %s256 = sadd.f32 %s234, %s255
      %vm257 = vcmp.lt.f32.partialorder %v203, 0.0
      %v258 = vceil.f32 %v203
      %v259 = vfloor.f32 %v203
      %v260 = vsel %vm257, %v258, %v259
      %v261 = vsub.f32 %v211, %v260
      %v262 = vand.u32 2147483647, %v261
      %vm263 = vcmp.lt.f32.partialorder %v262, 1.0
      %v264 = vmul.f32 %v261, 0.5
      %v265 = vmul.f32 %v264, %v261
      %v266 = vsub.f32 %v262, 0.5
      %v267 = vsel %vm263, %v265, %v266
      %v268 = vsel %vm182, %v267, 0.0
      %269 = vadd.xlane.f32.xlu0 %v268
      %v270 = vpop.xlane.xlu0 %269
      %v271 = vrot.slane %v270, 4
      %v272 = vadd.f32 %v270, %v271
      %v273 = vrot.slane %v272, 2
      %v274 = vadd.f32 %v272, %v273
      %v275 = vrot.slane %v274, 1
      %v276 = vadd.f32 %v274, %v275
      %s277 = vtos %v276
      %s278 = sadd.f32 %s256, %s277
      %vm279 = vcmp.lt.f32.partialorder %v208, 0.0
      %v280 = vceil.f32 %v208
      %v281 = vfloor.f32 %v208
      %v282 = vsel %vm279, %v280, %v281
      %v283 = vsub.f32 %v212, %v282
      %v284 = vand.u32 2147483647, %v283
      %vm285 = vcmp.lt.f32.partialorder %v284, 1.0
      %v286 = vmul.f32 %v283, 0.5
      %v287 = vmul.f32 %v286, %v283
      %v288 = vsub.f32 %v284, 0.5
      %v289 = vsel %vm285, %v287, %v288
      %v290 = vsel %vm182, %v289, 0.0
      %291 = vadd.xlane.f32.xlu0 %v290
      %v292 = vpop.xlane.xlu0 %291
      %v293 = vrot.slane %v292, 4
      %v294 = vadd.f32 %v292, %v293
      %v295 = vrot.slane %v294, 2
      %v296 = vadd.f32 %v294, %v295
      %v297 = vrot.slane %v296, 1
      %v298 = vadd.f32 %v296, %v297
      %s299 = vtos %v298
      %s300 = sadd.f32 %s278, %s299
      %301 = vst [vmem:[#allocation5] sm:$0xff] %v181
      %302 = vst [vmem:[#allocation2] sm:$0xff] -1e+30
      %303 = vst [vmem:[#allocation3] sm:$0xff] 0.0
      %304 = vst [vmem:[#allocation4] sm:$0xff] 0.0
      %vm305 = vcmp.eq.s32.totalorder %v85, 0
      %v306 = vstv %s300
      %v307 = vsel %vm305, %v306, 0.0
      %308 = vst [vmem:[#allocation14] sm:$0xff] %v307
    $region37: #{tpu_custom_call.1} parent=1 // pred_fallthru
      _
    %v309 = vld [vmem:[#allocation12] sm:$0xff]
    %v310 = vld [vmem:[#allocation12 + $0x8] sm:$0xff]
    %v311 = vld [vmem:[#allocation12 + $0x10] sm:$0xff]
    %v312 = vld [vmem:[#allocation12 + $0x18] sm:$0xff]
    %v313 = vld [vmem:[#allocation12 + $0x20] sm:$0xff]
    %v314 = vld [vmem:[#allocation12 + $0x28] sm:$0xff]
    %v315 = vld [vmem:[#allocation12 + $0x30] sm:$0xff]
    %v316 = vld [vmem:[#allocation12 + $0x38] sm:$0xff]
    %v317 = vmax.f32 %v309, %v313
    %v318 = vmax.f32 %v310, %v314
    %v319 = vmax.f32 %v311, %v315
    %v320 = vmax.f32 %v312, %v316
    %v321 = vmax.f32 %v317, %v318
    %v322 = vmax.f32 %v319, %v320
    %v323 = vmax.f32 %v321, %v322
    %v324 = vld [vmem:[#allocation2] sm:$0xff]
    %v325 = vmax.f32 %v324, %v323
    %v326 = vld [vmem:[#allocation3] sm:$0xff]
    %v327 = vsub.f32 %v324, %v325
    %v328 = vmul.f32 %v327, 1.442695
    %v329 = vpow.pop %v328
    %v330 = vmul.f32 %v326, %v329
    %v331 = vsub.f32 %v309, %v325
    %v332 = vsub.f32 %v310, %v325
    %v333 = vsub.f32 %v311, %v325
    %v334 = vsub.f32 %v312, %v325
    %v335 = vsub.f32 %v313, %v325
    %v336 = vsub.f32 %v314, %v325
    %v337 = vsub.f32 %v315, %v325
    %v338 = vsub.f32 %v316, %v325
    %v339 = vmul.f32 %v331, 1.442695
    %v340 = vpow.pop %v339
    %v341 = vmul.f32 %v332, 1.442695
    %v342 = vpow.pop %v341
    %v343 = vmul.f32 %v333, 1.442695
    %v344 = vpow.pop %v343
    %v345 = vmul.f32 %v334, 1.442695
    %v346 = vpow.pop %v345
    %v347 = vmul.f32 %v335, 1.442695
    %v348 = vpow.pop %v347
    %v349 = vmul.f32 %v336, 1.442695
    %v350 = vpow.pop %v349
    %v351 = vmul.f32 %v337, 1.442695
    %v352 = vpow.pop %v351
    %v353 = vmul.f32 %v338, 1.442695
    %v354 = vpow.pop %v353
    %v355 = vadd.f32 %v340, %v342
    %v356 = vadd.f32 %v355, %v344
    %v357 = vadd.f32 %v356, %v346
    %v358 = vadd.f32 %v357, %v348
    %v359 = vadd.f32 %v358, %v350
    %v360 = vadd.f32 %v359, %v352
    %v361 = vadd.f32 %v360, %v354
    %v362 = vadd.f32 %v330, %v361
    %363 = vst [vmem:[#allocation3] sm:$0xff] %v362
    %364 = vst [vmem:[#allocation2] sm:$0xff] %v325
    %v365 = vld [vmem:[#allocation5] sm:$0xff]
    %v366 = vld [vmem:[#allocation4] sm:$0xff]
    %s367 = smul.u32 0, 8
    %v368 = vstv %s367
    %vm369 = vcmp.eq.s32.totalorder %v365, %v368
    %v370 = vsel %vm369, %v309, 0.0
    %v371 = vadd.f32 %v366, %v370
    %s372 = sadd.s32 %s367, 1
    %v373 = vstv %s372
    %vm374 = vcmp.eq.s32.totalorder %v365, %v373
    %v375 = vsel %vm374, %v310, 0.0
    %v376 = vadd.f32 %v371, %v375
    %s377 = sadd.s32 %s367, 2
    %v378 = vstv %s377
    %vm379 = vcmp.eq.s32.totalorder %v365, %v378
    %v380 = vsel %vm379, %v311, 0.0
    %v381 = vadd.f32 %v376, %v380
    %s382 = sadd.s32 %s367, 3
    %v383 = vstv %s382
    %vm384 = vcmp.eq.s32.totalorder %v365, %v383
    %v385 = vsel %vm384, %v312, 0.0
    %v386 = vadd.f32 %v381, %v385
    %s387 = sadd.s32 %s367, 4
    %v388 = vstv %s387
    %vm389 = vcmp.eq.s32.totalorder %v365, %v388
    %v390 = vsel %vm389, %v313, 0.0
    %v391 = vadd.f32 %v386, %v390
    %s392 = sadd.s32 %s367, 5
    %v393 = vstv %s392
    %vm394 = vcmp.eq.s32.totalorder %v365, %v393
    %v395 = vsel %vm394, %v314, 0.0
    %v396 = vadd.f32 %v391, %v395
    %s397 = sadd.s32 %s367, 6
    %v398 = vstv %s397
    %vm399 = vcmp.eq.s32.totalorder %v365, %v398
    %v400 = vsel %vm399, %v315, 0.0
    %v401 = vadd.f32 %v396, %v400
    %s402 = sadd.s32 %s367, 7
    %v403 = vstv %s402
    %vm404 = vcmp.eq.s32.totalorder %v365, %v403
    %v405 = vsel %vm404, %v316, 0.0
    %v406 = vadd.f32 %v401, %v405
    %407 = vst [vmem:[#allocation4] sm:$0xff] %v406
    // Predicated region
    $region45: #{tpu_custom_call.1} parent=1 // pred_check
      %p408 = pneg %p86
    $region46: #{tpu_custom_call.1} parent=1 // pred_check_branch
      %410 = sbr.rel (%p408) target = $region48
    $region47: #{tpu_custom_call.1} parent=1 // pred_region
      %v411 = vld [vmem:[#allocation5] sm:$0xff]
      %vm412 = vcmp.gt.s32.totalorder %v411, 0
      %v413 = vld [vmem:[#allocation2] sm:$0xff]
      %v414 = vld [vmem:[#allocation3] sm:$0xff]
      %v415 = vlog2.pop %v414
      %v416 = vmul.f32 %v415, 0.6931472
      %v417 = vadd.f32 %v413, %v416
      %v418 = vld [vmem:[#allocation4] sm:$0xff]
      %v419 = vsub.f32 %v417, %v418
      %v420 = vsel %vm412, 1, 0
      %v421 = vcvt.s32.f32 %v420
      %422 = vadd.xlane.f32.xlu0 %v421
      %v423 = vpop.xlane.xlu0 %422
      %v424 = vmul.f32 %v423, 3.0
      %v425 = vmin.f32 %v424, 128.0
      %v426 = vsel %vm412, %v419, 0.0
      %427 = vadd.xlane.f32.xlu0 %v426
      %v428 = vpop.xlane.xlu0 %427
      %v429 = vrot.slane %v428, 4
      %v430 = vadd.f32 %v428, %v429
      %v431 = vrot.slane %v430, 2
      %v432 = vadd.f32 %v430, %v431
      %v433 = vrot.slane %v432, 1
      %v434 = vadd.f32 %v432, %v433
      %s435 = vtos %v434
      %v436 = vsel %vm412, 0.0, %v419
      %437 = vmax.xlane.f32.xlu0 %v436
      %v438 = vpop.xlane.xlu0 %437
      %v439 = vadd.f32 %v438, 1.0
      loop: start=0, step=1, limit=30
      $region49: #{tpu_custom_call.1} parent=47 // loop_pre_header
        _
      $region50: #{tpu_custom_call.1} parent=47 // loop_header
        %s441 = sphi 0, %s445
        %p442 = scmp.ge.s32.totalorder %s441, 30
        %v446 = vphi 0.0, %v456
        %v447 = vphi %v439, %v457
      $region51: #{tpu_custom_call.1} parent=47 // loop_header_branch
        %444 = sbr.rel (%p442) target = $region55
      $region52: #{tpu_custom_call.1} parent=47 // loop_body
        %v448 = vadd.f32 %v446, %v447
        %v449 = vmul.f32 %v448, 0.5
        %vm450 = vcmp.ge.f32.partialorder %v436, %v449
        %v451 = vsel %vm450, 1, 0
        %v452 = vcvt.s32.f32 %v451
        %453 = vadd.xlane.f32.xlu0 %v452
        %v454 = vpop.xlane.xlu0 %453
        %vm455 = vcmp.ge.f32.partialorder %v454, %v425
        %v456 = vsel %vm455, %v449, %v446
        %v457 = vsel %vm455, %v447, %v449
      $region53: #{tpu_custom_call.1} parent=47 // loop_footer
        %s445 = sadd.s32 1, %s441
      $region54: #{tpu_custom_call.1} parent=47 // loop_footer_branch
        %440 = sbr.rel target = $region50
      $region55: #{tpu_custom_call.1} parent=47 // loop_exit
        _
      %vm458 = vcmp.gt.f32.partialorder %v436, %v446
      %v459 = vsel %vm458, 1, 0
      %v460 = vcvt.s32.f32 %v459
      %461 = vadd.xlane.f32.xlu0 %v460
      %v462 = vpop.xlane.xlu0 %461
      %v463 = vsel %vm458, %v436, 0.0
      %464 = vadd.xlane.f32.xlu0 %v463
      %v465 = vpop.xlane.xlu0 %464
      %v466 = vsub.f32 %v425, %v462
      %v467 = vmul.f32 %v466, %v446
      %v468 = vadd.f32 %v465, %v467
      %vm469 = vcmask 7168
      %v470 = vsel %vm469, %v468, 0.0
      %471 = vadd.xlane.f32.xlu0 %v470
      %v472 = vpop.xlane.xlu0 %471
      %v473 = vrot.slane %v472, 4
      %v474 = vadd.f32 %v472, %v473
      %v475 = vrot.slane %v474, 2
      %v476 = vadd.f32 %v474, %v475
      %v477 = vrot.slane %v476, 1
      %v478 = vadd.f32 %v476, %v477
      %s479 = vtos %v478
      %s480 = sadd.f32 %s435, %s479
      %v481 = vsel %vm469, %v423, 0.0
      %482 = vadd.xlane.f32.xlu0 %v481
      %v483 = vpop.xlane.xlu0 %482
      %v484 = vrot.slane %v483, 4
      %v485 = vadd.f32 %v483, %v484
      %v486 = vrot.slane %v485, 2
      %v487 = vadd.f32 %v485, %v486
      %v488 = vrot.slane %v487, 1
      %v489 = vadd.f32 %v487, %v488
      %s490 = vtos %v489
      %v491 = vld [vmem:[#allocation14] sm:$0xff]
      %vm492 = vcmp.eq.s32.totalorder %v85, 1
      %v493 = vstv %s480
      %v494 = vsel %vm492, %v493, 0.0
      %v495 = vadd.f32 %v491, %v494
      %vm496 = vcmp.eq.s32.totalorder %v85, 2
      %v497 = vstv %s490
      %v498 = vsel %vm496, %v497, 0.0
      %v499 = vadd.f32 %v495, %v498
      %500 = vst [vmem:[#allocation14] sm:$0xff] %v499
    $region48: #{tpu_custom_call.1} parent=1 // pred_fallthru
      _
    // Predicated region
    $region56: #{tpu_custom_call.1} parent=1 // pred_check
      _
    $region57: #{tpu_custom_call.1} parent=1 // pred_check_branch
      %502 = sbr.rel (0) target = $region59
    $region58: #{tpu_custom_call.1} parent=1 // pred_region
      %504 = vsyncadd [#allocation8], 0
      %s506 = sshll.u32 [#allocation14], 4
      %s507 = int_to_ptr.vmem [resolvable:$true] %s506
      %s508 = sshll.u32 %s4, 4
      %s509 = int_to_ptr.hbm [resolvable:$true] %s508
      %511 = dma.vmem_to_hbm [thread:$0]  %s507, 128, %s509, [#allocation8]
    $region59: #{tpu_custom_call.1} parent=1 // pred_fallthru
      _
    // Predicated region
    $region60: #{tpu_custom_call.1} parent=1 // pred_check
      _
    $region61: #{tpu_custom_call.1} parent=1 // pred_check_branch
      %513 = sbr.rel (0) target = $region63
    $region62: #{tpu_custom_call.1} parent=1 // pred_region
      %515 = dma.done [#allocation8], 128
    $region63: #{tpu_custom_call.1} parent=1 // pred_fallthru
      _
    %516 = vsyncpa [#allocation7], 1
    %517 = vsyncpa [#allocation10], 1
    %518 = vsyncpa [#allocation13], 1
    %519 = vsyncpa [#allocation8], 1

</llo_original>
